<compile_context>
chip_gen: v7x
topology: tpu7x:2x2x1
jax: 0.10.0
libtpu: 0.0.40
codegen_flags: <defaults>
</compile_context>

<pallas_src>
import functools
import math

import jax
import jax.numpy as jnp
from jax.experimental import pallas as pl
from jax.experimental.pallas import tpu as pltpu


def _round_up(a, b):
    return (a + b - 1) // b * b


def _xlogx(v):
    # 0 * log(0) := 0 (KLDivLoss convention for zero target entries).
    return 0.0 if v <= 0.0 else float(v) * math.log(float(v))


def _label_smoothing_kernel(x_ref, tgt_ref, out_ref, *, n_rows, block_rows,
                            padding_idx, confidence, smooth_val, row_const):
    """One row tile -> one (1, 8, 128) partial-sum slab.

    Per non-padding row (closed form, constants precomputed in Python):
      KL  = [conf*log(conf) + (V-2)*smooth*log(smooth)]
            - [conf*x[tgt] + smooth*(rowsum(x) - x[:,pad] - x[tgt])]
      NLL = -x[tgt]
    """
    i = pl.program_id(0)

    x = x_ref[...].astype(jnp.float32)          # (TR, V); cast after DMA
    tgt = tgt_ref[...]                          # (TR, 1) int32
    tr, v = x.shape

    # Tail-row mask: x / target are NOT padded in the wrapper; rows past
    # n_rows (garbage in the last partial block) and padding-target rows
    # contribute exactly 0 to both sums.
    row = i * block_rows + jax.lax.broadcasted_iota(jnp.int32, (tr, 1), 0)
    valid = (row < n_rows) & (tgt != padding_idx)          # (TR, 1)

    col = jax.lax.broadcasted_iota(jnp.int32, (tr, v), 1)
    # x[row, tgt[row]] via one masked select + row-sum (reused by KL and NLL).
    x_tgt = jnp.sum(jnp.where(col == tgt, x, 0.0), axis=1, keepdims=True)
    x_sum = jnp.sum(x, axis=1, keepdims=True)
    x_pad = x[:, padding_idx:padding_idx + 1]   # static column slice

    cross = confidence * x_tgt + smooth_val * (x_sum - x_pad - x_tgt)
    kl_part = jnp.sum(jnp.where(valid, jnp.float32(row_const) - cross, 0.0))
    nll_part = jnp.sum(jnp.where(valid, -x_tgt, 0.0))

    # Lane-dense (8,128) per-block output: [0,0,0]=KL partial, [0,0,1]=NLL
    # partial, rest zero. Written exactly once per grid step -> the row axis
    # can be "parallel" (megacore on v7x) with no accumulator race.
    sub = jax.lax.broadcasted_iota(jnp.int32, out_ref.shape, 1)
    lane = jax.lax.broadcasted_iota(jnp.int32, out_ref.shape, 2)
    out_ref[...] = jnp.where(
        (sub == 0) & (lane == 0), kl_part,
        jnp.where((sub == 0) & (lane == 1), nll_part, jnp.float32(0.0)))


def label_smoothing_forward(x, target, *, size, padding_idx, smoothing,
                            block_rows=None):
    """x: (N, size) log-probs (f32 or bf16), target: (N,) ints -> (kl, nll)."""
    n, v = x.shape
    assert v == size

    confidence = 1.0 - smoothing
    if smoothing != 0.0:
        assert size > 2, "smoothing/(size-2) requires size > 2"
        smooth_val = smoothing / (size - 2)
    else:
        smooth_val = 0.0
    row_const = _xlogx(confidence) + (size - 2) * _xlogx(smooth_val)

    if block_rows is None:
        # Largest row tile whose f32 working set stays ~4 MiB: comfortably
        # double-buffered + temporaries inside scoped VMEM on v5e/v6e/v7x.
        budget = 4 << 20
        block_rows = min(1024, max(8, (budget // (v * 4)) // 8 * 8))
    block_rows = _round_up(max(8, min(block_rows, _round_up(n, 8))), 8)
    nb = pl.cdiv(n, block_rows)

    target2d = target.reshape(n, 1).astype(jnp.int32)

    kernel = functools.partial(
        _label_smoothing_kernel, n_rows=n, block_rows=block_rows,
        padding_idx=padding_idx, confidence=confidence,
        smooth_val=smooth_val, row_const=row_const)

    tile_f32 = block_rows * v * 4
    vmem_limit = int(min(48 << 20, max(16 << 20, 4 * tile_f32 + (4 << 20))))

    partials = pl.pallas_call(
        kernel,
        out_shape=jax.ShapeDtypeStruct((nb, 8, 128), jnp.float32),
        grid_spec=pltpu.PrefetchScalarGridSpec(
            num_scalar_prefetch=0,
            grid=(nb,),
            in_specs=[
                # x is DMA'd at its own dtype (bf16 stays bf16 on the wire);
                # the f32 cast happens inside the kernel.
                pl.BlockSpec((block_rows, v), lambda i: (i, 0)),
                pl.BlockSpec((block_rows, 1), lambda i: (i, 0)),
            ],
            out_specs=pl.BlockSpec((1, 8, 128), lambda i: (i, 0, 0)),
        ),
        compiler_params=pltpu.CompilerParams(
            dimension_semantics=("parallel",),
            vmem_limit_bytes=vmem_limit),
    )(x, target2d)

    kl = jnp.sum(partials[:, 0, 0])
    nll = jnp.sum(partials[:, 0, 1])
    return kl, nll


def _reference(x, target, *, size, padding_idx, smoothing):
    """Plain-JAX reference mirroring the PyTorch semantics."""
    n, v = x.shape
    x = x.astype(jnp.float32)
    confidence = 1.0 - smoothing
    smooth_val = smoothing / (size - 2) if smoothing != 0.0 else 0.0
    col = jnp.arange(v)[None, :]
    tgt = target[:, None]
    td = jnp.where(col == tgt, confidence, smooth_val).astype(jnp.float32)
    td = jnp.where(col == padding_idx, 0.0, td)
    td = jnp.where(tgt == padding_idx, 0.0, td)
    kl = jnp.sum(jnp.where(td > 0.0,
                           td * (jnp.log(jnp.where(td > 0.0, td, 1.0)) - x),
                           0.0))
    nll = jnp.sum(jnp.where((col == tgt) & (tgt != padding_idx), -x, 0.0))
    return kl, nll


if __name__ == "__main__":
    # LabelSmoothing(size=32, padding_idx=0, smoothing=0.1)
    SIZE = 32
    PADDING_IDX = 0
    SMOOTHING = 0.1
    N = 100  # batch*seq tokens; deliberately not a multiple of the row tile

    key = jax.random.PRNGKey(0)
    k_logits, k_tgt = jax.random.split(key)
    logits = jax.random.normal(k_logits, (N, SIZE), dtype=jnp.float32)
    x = jax.nn.log_softmax(logits, axis=-1)  # module expects log-probs
    target = jax.random.randint(k_tgt, (N,), 0, SIZE, dtype=jnp.int32)
    # Force some padding targets to exercise the masking path.
    target = (target.at[1].set(PADDING_IDX)
                    .at[5].set(PADDING_IDX)
                    .at[97].set(PADDING_IDX))

    # block_rows=64 -> 2 grid blocks, the second one partial (tail masking).
    kl, nll = label_smoothing_forward(
        x, target, size=SIZE, padding_idx=PADDING_IDX, smoothing=SMOOTHING,
        block_rows=64)
    kl, nll = jax.block_until_ready((kl, nll))

    kl_ref, nll_ref = _reference(
        x, target, size=SIZE, padding_idx=PADDING_IDX, smoothing=SMOOTHING)
    assert jnp.allclose(kl, kl_ref, rtol=1e-5, atol=1e-4), (kl, kl_ref)
    assert jnp.allclose(nll, nll_ref, rtol=1e-5, atol=1e-4), (nll, nll_ref)

    print("KERNEL_OK")
</pallas_src>

<mosaic_0001>
module attributes {stable_mosaic.version = 11 : i64} {
  func.func @_label_smoothing_kernel(%arg0: i32, %arg1: memref<64x32xf32, #tpu.memory_space<vmem>>, %arg2: memref<64x1xi32, #tpu.memory_space<vmem>>, %arg3: memref<1x8x128xf32, #tpu.memory_space<vmem>>) attributes {dimension_semantics = [#tpu.dimension_semantics<parallel>], iteration_bounds = array<i64: 2>, scalar_prefetch = 0 : i64, scratch_operands = 0 : i64, tpu.core_type = #tpu.core_type<tc>, window_params = [{transform_indices = @transform_0, window_bounds = array<i64: 64, 32>}, {transform_indices = @transform_1, window_bounds = array<i64: 64, 1>}, {transform_indices = @transform_2, window_bounds = array<i64: 1, 8, 128>}]} {
    %c0 = arith.constant 0 : index
    %c0_0 = arith.constant 0 : index
    %0 = vector.load %arg1[%c0, %c0_0] : memref<64x32xf32, #tpu.memory_space<vmem>>, vector<64x32xf32>
    %c0_1 = arith.constant 0 : index
    %c0_2 = arith.constant 0 : index
    %1 = vector.load %arg2[%c0_1, %c0_2] : memref<64x1xi32, #tpu.memory_space<vmem>>, vector<64x1xi32>
    %c64_i32 = arith.constant 64 : i32
    %2 = arith.muli %arg0, %c64_i32 : i32
    %3 = tpu.iota {dimensions = array<i32: 0>} : vector<64x1xi32>
    %4 = vector.broadcast %2 : i32 to vector<64x1xi32>
    %5 = arith.addi %4, %3 : vector<64x1xi32>
    %c100_i32 = arith.constant 100 : i32
    %6 = vector.broadcast %c100_i32 : i32 to vector<64x1xi32>
    %7 = arith.cmpi slt, %5, %6 : vector<64x1xi32>
    %c0_i32 = arith.constant 0 : i32
    %8 = vector.broadcast %c0_i32 : i32 to vector<64x1xi32>
    %9 = arith.cmpi ne, %1, %8 : vector<64x1xi32>
    %10 = arith.andi %7, %9 : vector<64x1xi1>
    %11 = tpu.iota {dimensions = array<i32: 1>} : vector<64x32xi32>
    %12 = vector.broadcast %1 : vector<64x1xi32> to vector<64x32xi32>
    %13 = arith.cmpi eq, %11, %12 : vector<64x32xi32>
    %cst = arith.constant 0.000000e+00 : f32
    %14 = vector.broadcast %cst : f32 to vector<64x32xf32>
    %15 = arith.select %13, %0, %14 : vector<64x32xi1>, vector<64x32xf32>
    %cst_3 = arith.constant dense<0.000000e+00> : vector<64xf32>
    %16 = vector.multi_reduction <add>, %15, %cst_3 [1] : vector<64x32xf32> to vector<64xf32>
    %17 = vector.shape_cast %16 : vector<64xf32> to vector<64x1xf32>
    %cst_4 = arith.constant dense<0.000000e+00> : vector<64xf32>
    %18 = vector.multi_reduction <add>, %0, %cst_4 [1] : vector<64x32xf32> to vector<64xf32>
    %19 = vector.shape_cast %18 : vector<64xf32> to vector<64x1xf32>
    %20 = vector.extract_strided_slice %0 {offsets = [0, 0], sizes = [64, 1], strides = [1, 1]} : vector<64x32xf32> to vector<64x1xf32>
    %cst_5 = arith.constant 0.899999976 : f32
    %21 = vector.broadcast %cst_5 : f32 to vector<64x1xf32>
    %22 = arith.mulf %21, %17 : vector<64x1xf32>
    %23 = arith.subf %19, %20 : vector<64x1xf32>
    %24 = arith.subf %23, %17 : vector<64x1xf32>
    %cst_6 = arith.constant 0.00333333341 : f32
    %25 = vector.broadcast %cst_6 : f32 to vector<64x1xf32>
    %26 = arith.mulf %25, %24 : vector<64x1xf32>
    %27 = arith.addf %22, %26 : vector<64x1xf32>
    %cst_7 = arith.constant -0.665202737 : f32
    %28 = vector.broadcast %cst_7 : f32 to vector<64x1xf32>
    %29 = arith.subf %28, %27 : vector<64x1xf32>
    %cst_8 = arith.constant 0.000000e+00 : f32
    %30 = vector.broadcast %cst_8 : f32 to vector<64x1xf32>
    %31 = arith.select %10, %29, %30 : vector<64x1xi1>, vector<64x1xf32>
    %32 = vector.shape_cast %31 : vector<64x1xf32> to vector<1x64x1xf32>
    %cst_9 = arith.constant dense<0.000000e+00> : vector<1xf32>
    %33 = vector.multi_reduction <add>, %32, %cst_9 [1, 2] : vector<1x64x1xf32> to vector<1xf32>
    %34 = vector.shape_cast %33 : vector<1xf32> to vector<1x1x1xf32>
    %35 = vector.extract %34[0, 0, 0] : f32 from vector<1x1x1xf32>
    %cst_10 = arith.constant 0.000000e+00 : f32
    %36 = vector.broadcast %cst_10 : f32 to vector<64x1xf32>
    %37 = arith.subf %36, %17 : vector<64x1xf32>
    %cst_11 = arith.constant 0.000000e+00 : f32
    %38 = vector.broadcast %cst_11 : f32 to vector<64x1xf32>
    %39 = arith.select %10, %37, %38 : vector<64x1xi1>, vector<64x1xf32>
    %40 = vector.shape_cast %39 : vector<64x1xf32> to vector<1x64x1xf32>
    %cst_12 = arith.constant dense<0.000000e+00> : vector<1xf32>
    %41 = vector.multi_reduction <add>, %40, %cst_12 [1, 2] : vector<1x64x1xf32> to vector<1xf32>
    %42 = vector.shape_cast %41 : vector<1xf32> to vector<1x1x1xf32>
    %43 = vector.extract %42[0, 0, 0] : f32 from vector<1x1x1xf32>
    %44 = tpu.iota {dimensions = array<i32: 1>} : vector<1x8x128xi32>
    %45 = tpu.iota {dimensions = array<i32: 2>} : vector<1x8x128xi32>
    %c0_i32_13 = arith.constant 0 : i32
    %46 = vector.broadcast %c0_i32_13 : i32 to vector<1x8x128xi32>
    %47 = arith.cmpi eq, %44, %46 : vector<1x8x128xi32>
    %c0_i32_14 = arith.constant 0 : i32
    %48 = vector.broadcast %c0_i32_14 : i32 to vector<1x8x128xi32>
    %49 = arith.cmpi eq, %45, %48 : vector<1x8x128xi32>
    %50 = arith.andi %47, %49 : vector<1x8x128xi1>
    %c0_i32_15 = arith.constant 0 : i32
    %51 = vector.broadcast %c0_i32_15 : i32 to vector<1x8x128xi32>
    %52 = arith.cmpi eq, %44, %51 : vector<1x8x128xi32>
    %c1_i32 = arith.constant 1 : i32
    %53 = vector.broadcast %c1_i32 : i32 to vector<1x8x128xi32>
    %54 = arith.cmpi eq, %45, %53 : vector<1x8x128xi32>
    %55 = arith.andi %52, %54 : vector<1x8x128xi1>
    %cst_16 = arith.constant 0.000000e+00 : f32
    %56 = vector.broadcast %43 : f32 to vector<1x8x128xf32>
    %57 = vector.broadcast %cst_16 : f32 to vector<1x8x128xf32>
    %58 = arith.select %55, %56, %57 : vector<1x8x128xi1>, vector<1x8x128xf32>
    %59 = vector.broadcast %35 : f32 to vector<1x8x128xf32>
    %60 = arith.select %50, %59, %58 : vector<1x8x128xi1>, vector<1x8x128xf32>
    %c0_17 = arith.constant 0 : index
    %c0_18 = arith.constant 0 : index
    %c0_19 = arith.constant 0 : index
    %61 = vector.load %arg3[%c0_17, %c0_18, %c0_19] : memref<1x8x128xf32, #tpu.memory_space<vmem>>, vector<1x8x128xf32>
    tpu.vector_store %arg3[%c0_17, %c0_18, %c0_19], %60 {strides = array<i32>} : memref<1x8x128xf32, #tpu.memory_space<vmem>>, vector<1x8x128xf32>,
    return
  }
  func.func @transform_0(%arg0: i32) -> (i32, i32) {
    %c0_i32 = arith.constant 0 : i32
    %c0_i32_0 = arith.constant 0 : i32
    return %arg0, %c0_i32 : i32, i32
  }
  func.func @transform_1(%arg0: i32) -> (i32, i32) {
    %c0_i32 = arith.constant 0 : i32
    %c0_i32_0 = arith.constant 0 : i32
    return %arg0, %c0_i32 : i32, i32
  }
  func.func @transform_2(%arg0: i32) -> (i32, i32, i32) {
    %c0_i32 = arith.constant 0 : i32
    %c0_i32_0 = arith.constant 0 : i32
    %c0_i32_1 = arith.constant 0 : i32
    return %arg0, %c0_i32, %c0_i32_0 : i32, i32, i32
  }
}

</mosaic_0001>

<llo_original>
// kernel: tpu_custom_call.1
$region0: #{tpu_custom_call.1}
  #allocation0 [shape = 'u32[]', space=smem, size = 0x4, offset = 0x4, fixed_abs, tag = 'smem constant byte address 0x4 - core index']
  #allocation1 [shape = 'u32[144,128]{1,0:T(1,128)}', space=vmem, size = 0x12000, scoped, tag = 'internal scratch']
  %s0 = inlined_call_operand.vmem [shape: f32[100,32], index: 0, kind: input, shape index: {}]
  %s1 = inlined_call_operand.vmem [shape: s32[100,1], index: 1, kind: input, shape index: {}]
  %s2 = inlined_call_operand.hbm [shape: f32[2,8,128], index: 2, kind: output, shape index: {}]
  %s3 = sld [smem:[#allocation0]]
  $region41: #{tpu_custom_call.1} parent=0
    _
  %s5 = ssub.s32 1, %s3
  %s6 = scalar_select 0, %s5, %s3
  $region1: #{tpu_custom_call.1} parent=0
    #allocation2 [shape = 'u8[8192]{0}', space=vmem, size = 0x2000, scoped, tag = 'output window, operand 0']
    #allocation3 [shape = 's32[2]{0}', space=sflag, size = 0x8, scoped, tag = 'scoped memory for tpu_custom_call.1']
    %7 = vsyncpa [#allocation3], 0
    %s8 = scalar_lea.sflag [#allocation3], 1
    %9 = vsyncpa %s8, 0
    loop: start=0, step=1, limit=4
    $region2: #{tpu_custom_call.1} parent=1 // loop_pre_header
      _
    $region3: #{tpu_custom_call.1} parent=1 // loop_header
      %s11 = sphi 0, %s15
      %p12 = scmp.ge.s32.totalorder %s11, 4
      %s21 = sphi 0, %s23
      %s24 = sphi 0, %s21
      %s25 = sphi 0, %s24
      %s41 = sphi 0, %s25
      %s47 = sphi 0, %s49
      %s50 = sphi 0, %s47
      %s51 = sphi 0, %s50
      %s67 = sphi 0, %s51
      %s73 = sphi 0, %s75
      %s76 = sphi 0, %s73
      %s77 = sphi 0, %s76
      %s93 = sphi 0, %s77
    $region4: #{tpu_custom_call.1} parent=1 // loop_header_branch
      %14 = sbr.rel (%p12) target = $region8
    $region5: #{tpu_custom_call.1} parent=1 // loop_body
      %s16 = ssub.s32 %s11, 1
      %s17 = ssub.s32 %s11, 2
      %s18 = sadd.s32 %s11, 1
      %s19 = ssub.s32 %s11, %s18
      %p20 = scmp.eq.s32.totalorder %s19, 0
      %s22 = sadd.s32 %s21, 1
      %s23 = scalar_select %p20, %s21, %s22
      %p26 = pneg %p20
      %p27 = scmp.eq.s32.totalorder %s11, 1
      %p28 = por %p26, %p27
      %p29 = scmp.ne.s32.totalorder %s21, %s24
      %p30 = scmp.eq.s32.totalorder %s11, 0
      %p31 = por %p29, %p30
      %p32 = scmp.ne.s32.totalorder %s21, %s24
      %p33 = scmp.eq.s32.totalorder %s16, 1
      %p34 = por %p32, %p33
      %p35 = scmp.ne.s32.totalorder %s24, %s25
      %p36 = scmp.eq.s32.totalorder %s16, 0
      %p37 = por %p35, %p36
      %p38 = scmp.ne.s32.totalorder %s24, %s25
      %p39 = scmp.eq.s32.totalorder %s17, 1
      %p40 = por %p38, %p39
      %p42 = scmp.ne.s32.totalorder %s25, %s41
      %p43 = scmp.eq.s32.totalorder %s17, 0
      %p44 = por %p42, %p43
      %s45 = ssub.s32 %s11, %s18
      %p46 = scmp.eq.s32.totalorder %s45, 0
      %s48 = sadd.s32 %s47, 1
      %s49 = scalar_select %p46, %s47, %s48
      %p52 = pneg %p46
      %p53 = scmp.eq.s32.totalorder %s11, 1
      %p54 = por %p52, %p53
      %p55 = scmp.ne.s32.totalorder %s47, %s50
      %p56 = scmp.eq.s32.totalorder %s11, 0
      %p57 = por %p55, %p56
      %p58 = scmp.ne.s32.totalorder %s47, %s50
      %p59 = scmp.eq.s32.totalorder %s16, 1
      %p60 = por %p58, %p59
      %p61 = scmp.ne.s32.totalorder %s50, %s51
      %p62 = scmp.eq.s32.totalorder %s16, 0
      %p63 = por %p61, %p62
      %p64 = scmp.ne.s32.totalorder %s50, %s51
      %p65 = scmp.eq.s32.totalorder %s17, 1
      %p66 = por %p64, %p65
      %p68 = scmp.ne.s32.totalorder %s51, %s67
      %p69 = scmp.eq.s32.totalorder %s17, 0
      %p70 = por %p68, %p69
      %s71 = ssub.s32 %s11, %s18
      %p72 = scmp.eq.s32.totalorder %s71, 0
      %s74 = sadd.s32 %s73, 1
      %s75 = scalar_select %p72, %s73, %s74
      %p78 = pneg %p72
      %p79 = scmp.eq.s32.totalorder %s11, 1
      %p80 = por %p78, %p79
      %p81 = scmp.ne.s32.totalorder %s73, %s76
      %p82 = scmp.eq.s32.totalorder %s11, 0
      %p83 = por %p81, %p82
      %p84 = scmp.ne.s32.totalorder %s73, %s76
      %p85 = scmp.eq.s32.totalorder %s16, 1
      %p86 = por %p84, %p85
      %p87 = scmp.ne.s32.totalorder %s76, %s77
      %p88 = scmp.eq.s32.totalorder %s16, 0
      %p89 = por %p87, %p88
      %p90 = scmp.ne.s32.totalorder %s76, %s77
      %p91 = scmp.eq.s32.totalorder %s17, 1
      %p92 = por %p90, %p91
      %p94 = scmp.ne.s32.totalorder %s77, %s93
      %p95 = scmp.eq.s32.totalorder %s17, 0
      %p96 = por %p94, %p95
      %p97 = scmp.le.s32.totalorder 1, %s11
      %p98 = scmp.lt.s32.totalorder %s11, 3
      %p99 = pnand %p97, %p98
      %p100 = pneg %p99
      // Predicated region
      $region9: #{tpu_custom_call.1} parent=5 // pred_check
        _
      $region10: #{tpu_custom_call.1} parent=5 // pred_check_branch
        %102 = sbr.rel (%p99) target = $region12
      $region11: #{tpu_custom_call.1} parent=5 // pred_region
        %s103 = ssub.s32 %s11, 1
      $region12: #{tpu_custom_call.1} parent=5 // pred_fallthru
        _
      %p104 = scmp.lt.s32.totalorder %s11, 2
      // Predicated region
      $region13: #{tpu_custom_call.1} parent=5 // pred_check
        %p105 = pneg %p104
      $region14: #{tpu_custom_call.1} parent=5 // pred_check_branch
        %107 = sbr.rel (%p105) target = $region16
      $region15: #{tpu_custom_call.1} parent=5 // pred_region
        // Predicated region
        $region17: #{tpu_custom_call.1} parent=15 // pred_check
          %p108 = pneg %p31
        $region18: #{tpu_custom_call.1} parent=15 // pred_check_branch
          %110 = sbr.rel (%p108) target = $region20
        $region19: #{tpu_custom_call.1} parent=15 // pred_region
          %s111 = smul.u32 8, %s11
          %s112 = ssub.s32 13, %s111
          %p113 = scmp.lt.s32.totalorder %s112, 8
          %s114 = scalar_select %p113, %s112, 8
          %s115 = smul.u32 128, %s114
          %p116 = scmp.lt.s32.totalorder %s111, 12
          %s117 = scalar_select %p116, %s111, 12
          %s118 = smul.addr %s117, 8
          %s119 = scalar_lea.vmem %s0, %s118
          %s120 = smul.u32 8, %s11
          %s121 = ssub.s32 13, %s120
          %p122 = scmp.lt.s32.totalorder %s121, 8
          %s123 = scalar_select %p122, %s121, 8
          %s124 = smul.u32 128, %s123
        $region20: #{tpu_custom_call.1} parent=15 // pred_fallthru
          _
        // Predicated region
        $region21: #{tpu_custom_call.1} parent=15 // pred_check
          %p125 = pneg %p57
        $region22: #{tpu_custom_call.1} parent=15 // pred_check_branch
          %127 = sbr.rel (%p125) target = $region24
        $region23: #{tpu_custom_call.1} parent=15 // pred_region
          %s128 = smul.u32 8, %s11
          %s129 = ssub.s32 13, %s128
          %p130 = scmp.lt.s32.totalorder %s129, 8
          %s131 = scalar_select %p130, %s129, 8
          %s132 = smul.u32 128, %s131
          %p133 = scmp.lt.s32.totalorder %s128, 12
          %s134 = scalar_select %p133, %s128, 12
          %s135 = smul.addr %s134, 8
          %s136 = scalar_lea.vmem %s1, %s135
          %s137 = smul.u32 8, %s11
          %s138 = ssub.s32 13, %s137
          %p139 = scmp.lt.s32.totalorder %s138, 8
          %s140 = scalar_select %p139, %s138, 8
          %s141 = smul.u32 128, %s140
        $region24: #{tpu_custom_call.1} parent=15 // pred_fallthru
          _
      $region16: #{tpu_custom_call.1} parent=5 // pred_fallthru
        _
      %p142 = scmp.le.s32.totalorder 1, %s11
      %p143 = scmp.lt.s32.totalorder %s11, 3
      %p144 = pnand %p142, %p143
      %p145 = pneg %p144
      // Predicated region
      $region25: #{tpu_custom_call.1} parent=5 // pred_check
        _
      $region26: #{tpu_custom_call.1} parent=5 // pred_check_branch
        %147 = sbr.rel (%p144) target = $region28
      $region27: #{tpu_custom_call.1} parent=5 // pred_region
        %s148 = ssub.s32 %s11, 1
        %s149 = smul.u32 8, %s16
        %s150 = ssub.s32 13, %s149
        %p151 = scmp.lt.s32.totalorder %s150, 8
        %s152 = scalar_select %p151, %s150, 8
        %s153 = smul.u32 128, %s152
        %p154 = scmp.lt.s32.totalorder %s149, 12
        %s155 = scalar_select %p154, %s149, 12
        %s156 = smul.addr %s155, 8
        %s157 = scalar_lea.vmem %s0, %s156
        %p158 = pneg %p37
        %p159 = pneg %p34
        %s160 = smul.u32 8, %s16
        %s161 = ssub.s32 13, %s160
        %p162 = scmp.lt.s32.totalorder %s161, 8
        %s163 = scalar_select %p162, %s161, 8
        %s164 = smul.u32 128, %s163
        %p165 = scmp.lt.s32.totalorder %s160, 12
        %s166 = scalar_select %p165, %s160, 12
        %s167 = smul.addr %s166, 8
        %s168 = scalar_lea.vmem %s1, %s167
        %p169 = pneg %p63
        %p170 = pneg %p60
        %p171 = pneg %p89
        %p172 = pneg %p86
        %s173 = sand.u32 %s76, 1
        %s174 = scalar_lea.sflag [#allocation3], %s173
        %s175 = sand.u32 %s76, 1
        %s176 = smul.addr %s175, 8
        %s177 = scalar_lea.vmem [#allocation2], %s176
        %s178 = smul.u32 8, %s16
        %s179 = ssub.s32 13, %s178
        %p180 = scmp.lt.s32.totalorder %s179, 8
        %s181 = scalar_select %p180, %s179, 8
        %s182 = smul.u32 128, %s181
        %p183 = scmp.lt.s32.totalorder %s178, 12
        %s184 = scalar_select %p183, %s178, 12
        %s185 = smul.addr %s184, 8
        %s186 = scalar_lea.vmem %s0, %s185
        %s187 = smul.u32 8, %s16
        %s188 = ssub.s32 13, %s187
        %p189 = scmp.lt.s32.totalorder %s188, 8
        %s190 = scalar_select %p189, %s188, 8
        %s191 = smul.u32 128, %s190
        %s192 = smul.u32 8, %s16
        %s193 = ssub.s32 13, %s192
        %p194 = scmp.lt.s32.totalorder %s193, 8
        %s195 = scalar_select %p194, %s193, 8
        %s196 = smul.u32 128, %s195
        %p197 = scmp.lt.s32.totalorder %s192, 12
        %s198 = scalar_select %p197, %s192, 12
        %s199 = smul.addr %s198, 8
        %s200 = scalar_lea.vmem %s1, %s199
        %s201 = smul.u32 8, %s16
        %s202 = ssub.s32 13, %s201
        %p203 = scmp.lt.s32.totalorder %s202, 8
        %s204 = scalar_select %p203, %s202, 8
        %s205 = smul.u32 128, %s204
        %v206 = vld [vmem:[%s186] sm:$0xff]
        %v207 = vld [vmem:[%s186 + $0x8] sm:$0xff]
        %v208 = vld [vmem:[%s186 + $0x10] sm:$0xff]
        %v209 = vld [vmem:[%s186 + $0x18] sm:$0xff]
        %v210 = vld [vmem:[%s186 + $0x20] sm:$0xff]
        %v211 = vld [vmem:[%s186 + $0x28] sm:$0xff]
        %v212 = vld [vmem:[%s186 + $0x30] sm:$0xff]
        %v213 = vld [vmem:[%s186 + $0x38] sm:$0xff]
        %v214 = vld [vmem:[%s200] sm:$0xff]
        %v215 = vld [vmem:[%s200 + $0x8] sm:$0xff]
        %v216 = vld [vmem:[%s200 + $0x10] sm:$0xff]
        %v217 = vld [vmem:[%s200 + $0x18] sm:$0xff]
        %v218 = vld [vmem:[%s200 + $0x20] sm:$0xff]
        %v219 = vld [vmem:[%s200 + $0x28] sm:$0xff]
        %v220 = vld [vmem:[%s200 + $0x30] sm:$0xff]
        %v221 = vld [vmem:[%s200 + $0x38] sm:$0xff]
        %s222 = smul.u32 %s16, 64
        %v223 = vlaneseq
        %v224 = vshrl.u32 %v223, 7
        %v225 = vadd.s32 %v224, 8
        %v226 = vadd.s32 %v224, 16
        %v227 = vadd.s32 %v224, 24
        %v228 = vadd.s32 %v224, 32
        %v229 = vadd.s32 %v224, 40
        %v230 = vadd.s32 %v224, 48
        %v231 = vadd.s32 %v224, 56
        %v232 = vstv %s222
        %v233 = vadd.s32 %v232, %v224
        %v234 = vadd.s32 %v232, %v225
        %v235 = vadd.s32 %v232, %v226
        %v236 = vadd.s32 %v232, %v227
        %v237 = vadd.s32 %v232, %v228
        %v238 = vadd.s32 %v232, %v229
        %v239 = vadd.s32 %v232, %v230
        %v240 = vadd.s32 %v232, %v231
        %vm241 = vcmp.lt.s32.totalorder %v233, 100
        %vm242 = vcmp.lt.s32.totalorder %v234, 100
        %vm243 = vcmp.lt.s32.totalorder %v235, 100
        %vm244 = vcmp.lt.s32.totalorder %v236, 100
        %vm245 = vcmp.lt.s32.totalorder %v237, 100
        %vm246 = vcmp.lt.s32.totalorder %v238, 100
        %vm247 = vcmp.lt.s32.totalorder %v239, 100
        %vm248 = vcmp.lt.s32.totalorder %v240, 100
        %vm249 = vcmp.ne.s32.totalorder %v214, 0
        %vm250 = vcmp.ne.s32.totalorder %v215, 0
        %vm251 = vcmp.ne.s32.totalorder %v216, 0
        %vm252 = vcmp.ne.s32.totalorder %v217, 0
        %vm253 = vcmp.ne.s32.totalorder %v218, 0
        %vm254 = vcmp.ne.s32.totalorder %v219, 0
        %vm255 = vcmp.ne.s32.totalorder %v220, 0
        %vm256 = vcmp.ne.s32.totalorder %v221, 0
        %vm257 = vmand %vm241, %vm249
        %vm258 = vmand %vm242, %vm250
        %vm259 = vmand %vm243, %vm251
        %vm260 = vmand %vm244, %vm252
        %vm261 = vmand %vm245, %vm253
        %vm262 = vmand %vm246, %vm254
        %vm263 = vmand %vm247, %vm255
        %vm264 = vmand %vm248, %vm256
        %v265 = vlaneseq
        %v266 = vand.u32 %v265, 127
        %267 = vset.pattern.permute.xlu0 0
        %268 = vperm.xlu0 %267, %v214
        %v269 = vpop.permute.xlu0 %268
        %270 = vset.pattern.permute.xlu0 0
        %271 = vperm.xlu0 %270, %v215
        %v272 = vpop.permute.xlu0 %271
        %273 = vset.pattern.permute.xlu0 0
        %274 = vperm.xlu0 %273, %v216
        %v275 = vpop.permute.xlu0 %274
        %276 = vset.pattern.permute.xlu0 0
        %277 = vperm.xlu0 %276, %v217
        %v278 = vpop.permute.xlu0 %277
        %279 = vset.pattern.permute.xlu0 0
        %280 = vperm.xlu0 %279, %v218
        %v281 = vpop.permute.xlu0 %280
        %282 = vset.pattern.permute.xlu0 0
        %283 = vperm.xlu0 %282, %v219
        %v284 = vpop.permute.xlu0 %283
        %285 = vset.pattern.permute.xlu0 0
        %286 = vperm.xlu0 %285, %v220
        %v287 = vpop.permute.xlu0 %286
        %288 = vset.pattern.permute.xlu0 0
        %289 = vperm.xlu0 %288, %v221
        %v290 = vpop.permute.xlu0 %289
        %vm291 = vcmp.eq.s32.totalorder %v266, %v269
        %vm292 = vcmp.eq.s32.totalorder %v266, %v272
        %vm293 = vcmp.eq.s32.totalorder %v266, %v275
        %vm294 = vcmp.eq.s32.totalorder %v266, %v278
        %vm295 = vcmp.eq.s32.totalorder %v266, %v281
        %vm296 = vcmp.eq.s32.totalorder %v266, %v284
        %vm297 = vcmp.eq.s32.totalorder %v266, %v287
        %vm298 = vcmp.eq.s32.totalorder %v266, %v290
        %v299 = vsel %vm291, %v206, 0.0
        %v300 = vsel %vm292, %v207, 0.0
        %v301 = vsel %vm293, %v208, 0.0
        %v302 = vsel %vm294, %v209, 0.0
        %v303 = vsel %vm295, %v210, 0.0
        %v304 = vsel %vm296, %v211, 0.0
        %v305 = vsel %vm297, %v212, 0.0
        %v306 = vsel %vm298, %v213, 0.0
        %vm307 = vcmask 261120
        %v308 = vsel %vm307, %v299, 0.0
        %309 = vadd.xlane.f32.xlu0 %v308
        %v310 = vpop.xlane.xlu0 %309
        %v311 = vsel %vm307, %v300, 0.0
        %312 = vadd.xlane.f32.xlu0 %v311
        %v313 = vpop.xlane.xlu0 %312
        %v314 = vsel %vm307, %v301, 0.0
        %315 = vadd.xlane.f32.xlu0 %v314
        %v316 = vpop.xlane.xlu0 %315
        %v317 = vsel %vm307, %v302, 0.0
        %318 = vadd.xlane.f32.xlu0 %v317
        %v319 = vpop.xlane.xlu0 %318
        %v320 = vsel %vm307, %v303, 0.0
        %321 = vadd.xlane.f32.xlu0 %v320
        %v322 = vpop.xlane.xlu0 %321
        %v323 = vsel %vm307, %v304, 0.0
        %324 = vadd.xlane.f32.xlu0 %v323
        %v325 = vpop.xlane.xlu0 %324
        %v326 = vsel %vm307, %v305, 0.0
        %327 = vadd.xlane.f32.xlu0 %v326
        %v328 = vpop.xlane.xlu0 %327
        %v329 = vsel %vm307, %v306, 0.0
        %330 = vadd.xlane.f32.xlu0 %v329
        %v331 = vpop.xlane.xlu0 %330
        %v332 = vsel %vm307, %v206, 0.0
        %333 = vadd.xlane.f32.xlu0 %v332
        %v334 = vpop.xlane.xlu0 %333
        %v335 = vsel %vm307, %v207, 0.0
        %336 = vadd.xlane.f32.xlu0 %v335
        %v337 = vpop.xlane.xlu0 %336
        %v338 = vsel %vm307, %v208, 0.0
        %339 = vadd.xlane.f32.xlu0 %v338
        %v340 = vpop.xlane.xlu0 %339
        %v341 = vsel %vm307, %v209, 0.0
        %342 = vadd.xlane.f32.xlu0 %v341
        %v343 = vpop.xlane.xlu0 %342
        %v344 = vsel %vm307, %v210, 0.0
        %345 = vadd.xlane.f32.xlu0 %v344
        %v346 = vpop.xlane.xlu0 %345
        %v347 = vsel %vm307, %v211, 0.0
        %348 = vadd.xlane.f32.xlu0 %v347
        %v349 = vpop.xlane.xlu0 %348
        %v350 = vsel %vm307, %v212, 0.0
        %351 = vadd.xlane.f32.xlu0 %v350
        %v352 = vpop.xlane.xlu0 %351
        %v353 = vsel %vm307, %v213, 0.0
        %354 = vadd.xlane.f32.xlu0 %v353
        %v355 = vpop.xlane.xlu0 %354
        %v356 = vmul.f32 %v310, 0.9
        %v357 = vmul.f32 %v313, 0.9
        %v358 = vmul.f32 %v316, 0.9
        %v359 = vmul.f32 %v319, 0.9
        %v360 = vmul.f32 %v322, 0.9
        %v361 = vmul.f32 %v325, 0.9
        %v362 = vmul.f32 %v328, 0.9
        %v363 = vmul.f32 %v331, 0.9
        %v364 = vsub.f32 %v334, %v206
        %v365 = vsub.f32 %v337, %v207
        %v366 = vsub.f32 %v340, %v208
        %v367 = vsub.f32 %v343, %v209
        %v368 = vsub.f32 %v346, %v210
        %v369 = vsub.f32 %v349, %v211
        %v370 = vsub.f32 %v352, %v212
        %v371 = vsub.f32 %v355, %v213
        %v372 = vsub.f32 %v364, %v310
        %v373 = vsub.f32 %v365, %v313
        %v374 = vsub.f32 %v366, %v316
        %v375 = vsub.f32 %v367, %v319
        %v376 = vsub.f32 %v368, %v322
        %v377 = vsub.f32 %v369, %v325
        %v378 = vsub.f32 %v370, %v328
        %v379 = vsub.f32 %v371, %v331
        %v380 = vmul.f32 %v372, 0.0033333334
        %v381 = vmul.f32 %v373, 0.0033333334
        %v382 = vmul.f32 %v374, 0.0033333334
        %v383 = vmul.f32 %v375, 0.0033333334
        %v384 = vmul.f32 %v376, 0.0033333334
        %v385 = vmul.f32 %v377, 0.0033333334
        %v386 = vmul.f32 %v378, 0.0033333334
        %v387 = vmul.f32 %v379, 0.0033333334
        %v388 = vadd.f32 %v356, %v380
        %v389 = vadd.f32 %v357, %v381
        %v390 = vadd.f32 %v358, %v382
        %v391 = vadd.f32 %v359, %v383
        %v392 = vadd.f32 %v360, %v384
        %v393 = vadd.f32 %v361, %v385
        %v394 = vadd.f32 %v362, %v386
        %v395 = vadd.f32 %v363, %v387
        %v396 = vsub.f32 -0.66520274, %v388
        %v397 = vsub.f32 -0.66520274, %v389
        %v398 = vsub.f32 -0.66520274, %v390
        %v399 = vsub.f32 -0.66520274, %v391
        %v400 = vsub.f32 -0.66520274, %v392
        %v401 = vsub.f32 -0.66520274, %v393
        %v402 = vsub.f32 -0.66520274, %v394
        %v403 = vsub.f32 -0.66520274, %v395
        %v404 = vsel %vm257, %v396, 0.0
        %v405 = vsel %vm258, %v397, 0.0
        %v406 = vsel %vm259, %v398, 0.0
        %v407 = vsel %vm260, %v399, 0.0
        %v408 = vsel %vm261, %v400, 0.0
        %v409 = vsel %vm262, %v401, 0.0
        %v410 = vsel %vm263, %v402, 0.0
        %v411 = vsel %vm264, %v403, 0.0
        %vm412 = vcmask 7168
        %v413 = vsel %vm412, %v404, 0.0
        %v414 = vsel %vm412, %v405, 0.0
        %v415 = vadd.f32 %v413, %v414
        %v416 = vsel %vm412, %v406, 0.0
        %v417 = vadd.f32 %v415, %v416
        %v418 = vsel %vm412, %v407, 0.0
        %v419 = vadd.f32 %v417, %v418
        %v420 = vsel %vm412, %v408, 0.0
        %v421 = vadd.f32 %v419, %v420
        %v422 = vsel %vm412, %v409, 0.0
        %v423 = vadd.f32 %v421, %v422
        %v424 = vsel %vm412, %v410, 0.0
        %v425 = vadd.f32 %v423, %v424
        %v426 = vsel %vm412, %v411, 0.0
        %v427 = vadd.f32 %v425, %v426
        %428 = vadd.xlane.f32.xlu0 %v427
        %v429 = vpop.xlane.xlu0 %428
        %v430 = vrot.slane %v429, 4
        %v431 = vadd.f32 %v429, %v430
        %v432 = vrot.slane %v431, 2
        %v433 = vadd.f32 %v431, %v432
        %v434 = vrot.slane %v433, 1
        %v435 = vadd.f32 %v433, %v434
        %s436 = vtos %v435
        %v437 = vsub.f32 0.0, %v310
        %v438 = vsub.f32 0.0, %v313
        %v439 = vsub.f32 0.0, %v316
        %v440 = vsub.f32 0.0, %v319
        %v441 = vsub.f32 0.0, %v322
        %v442 = vsub.f32 0.0, %v325
        %v443 = vsub.f32 0.0, %v328
        %v444 = vsub.f32 0.0, %v331
        %v445 = vsel %vm257, %v437, 0.0
        %v446 = vsel %vm258, %v438, 0.0
        %v447 = vsel %vm259, %v439, 0.0
        %v448 = vsel %vm260, %v440, 0.0
        %v449 = vsel %vm261, %v441, 0.0
        %v450 = vsel %vm262, %v442, 0.0
        %v451 = vsel %vm263, %v443, 0.0
        %v452 = vsel %vm264, %v444, 0.0
        %v453 = vsel %vm412, %v445, 0.0
        %v454 = vsel %vm412, %v446, 0.0
        %v455 = vadd.f32 %v453, %v454
        %v456 = vsel %vm412, %v447, 0.0
        %v457 = vadd.f32 %v455, %v456
        %v458 = vsel %vm412, %v448, 0.0
        %v459 = vadd.f32 %v457, %v458
        %v460 = vsel %vm412, %v449, 0.0
        %v461 = vadd.f32 %v459, %v460
        %v462 = vsel %vm412, %v450, 0.0
        %v463 = vadd.f32 %v461, %v462
        %v464 = vsel %vm412, %v451, 0.0
        %v465 = vadd.f32 %v463, %v464
        %v466 = vsel %vm412, %v452, 0.0
        %v467 = vadd.f32 %v465, %v466
        %468 = vadd.xlane.f32.xlu0 %v467
        %v469 = vpop.xlane.xlu0 %468
        %v470 = vrot.slane %v469, 4
        %v471 = vadd.f32 %v469, %v470
        %v472 = vrot.slane %v471, 2
        %v473 = vadd.f32 %v471, %v472
        %v474 = vrot.slane %v473, 1
        %v475 = vadd.f32 %v473, %v474
        %s476 = vtos %v475
        %vm477 = vcmp.eq.s32.totalorder %v224, 0
        %vm478 = vcmp.eq.s32.totalorder %v266, 0
        %vm479 = vmand %vm477, %vm478
        %vm480 = vcmp.eq.s32.totalorder %v266, 1
        %vm481 = vmand %vm477, %vm480
        %v482 = vstv %s476
        %v483 = vsel %vm481, %v482, 0.0
        %v484 = vstv %s436
        %v485 = vsel %vm479, %v484, %v483
        %486 = vst [vmem:[%s177] sm:$0xff] %v485
        %s487 = sand.u32 %s76, 1
        %s488 = scalar_lea.sflag [#allocation3], %s487
        %s489 = sand.u32 %s76, 1
        %s490 = smul.addr %s489, 8
        %s491 = scalar_lea.vmem [#allocation2], %s490
        // Predicated region
        $region29: #{tpu_custom_call.1} parent=27 // pred_check
          %p492 = pneg %p86
        $region30: #{tpu_custom_call.1} parent=27 // pred_check_branch
          %494 = sbr.rel (%p492) target = $region32
        $region31: #{tpu_custom_call.1} parent=27 // pred_region
          %s496 = ssub.s32 128, 128
          %497 = vsyncadd %s488, %s496
          %s498 = smul.addr %s16, 128
          %s499 = scalar_lea.hbm %s2, %s498
          %s501 = sshll.u32 %s491, 4
          %s502 = int_to_ptr.vmem [resolvable:$true] %s501
          %504 = dma.vmem_to_hbm [thread:$0]  %s502, 128, %s499, %s488
        $region32: #{tpu_custom_call.1} parent=27 // pred_fallthru
          _
      $region28: #{tpu_custom_call.1} parent=5 // pred_fallthru
        _
      %p505 = scmp.le.s32.totalorder 2, %s11
      // Predicated region
      $region33: #{tpu_custom_call.1} parent=5 // pred_check
        %p506 = pneg %p505
      $region34: #{tpu_custom_call.1} parent=5 // pred_check_branch
        %508 = sbr.rel (%p506) target = $region36
      $region35: #{tpu_custom_call.1} parent=5 // pred_region
        %s509 = ssub.s32 %s11, 2
        // Predicated region
        $region37: #{tpu_custom_call.1} parent=35 // pred_check
          %p510 = pneg %p92
        $region38: #{tpu_custom_call.1} parent=35 // pred_check_branch
          %512 = sbr.rel (%p510) target = $region40
        $region39: #{tpu_custom_call.1} parent=35 // pred_region
          %s513 = sand.u32 %s77, 1
          %s514 = scalar_lea.sflag [#allocation3], %s513
          %s515 = sand.u32 %s77, 1
          %s516 = smul.addr %s515, 8
          %s517 = scalar_lea.vmem [#allocation2], %s516
          %518 = dma.done %s514, 128
        $region40: #{tpu_custom_call.1} parent=35 // pred_fallthru
          _
      $region36: #{tpu_custom_call.1} parent=5 // pred_fallthru
        _
    $region6: #{tpu_custom_call.1} parent=1 // loop_footer
      %s15 = sadd.s32 1, %s11
    $region7: #{tpu_custom_call.1} parent=1 // loop_footer_branch
      %10 = sbr.rel target = $region3
    $region8: #{tpu_custom_call.1} parent=1 // loop_exit
      _
    %519 = vsyncpa [#allocation3], 1
    %s520 = scalar_lea.sflag [#allocation3], 1
    %521 = vsyncpa %s520, 1

</llo_original>
